<compile_context>
chip_gen: v5e
topology: v5e:2x2
jax: 0.10.0
libtpu: 0.0.40
codegen_flags: <defaults>
</compile_context>

<pallas_src>
import jax
import jax.numpy as jnp
from jax.experimental import pallas as pl
from jax.experimental.pallas import tpu as pltpu


def _elementwise_kernel(x_ref, o_ref):
    x = x_ref[...]
    # Single mul + add on the VALU: replaces add/sub/mul/div + 5 unrolled adds.
    # (No division -> no chance of an EUP reciprocal round-trip; constant-fold
    # differs from the PyTorch op order only by a few f32 ULP.)
    o_ref[...] = (x * 1.5 + 11.5).astype(o_ref.dtype)


def pt_module_forward(x):
    orig_shape = x.shape
    n = x.size
    # Lane-dense layout: last dim = 128 maps onto the full 128-lane axis.
    if n % 128 == 0:
        x2d = x.reshape(-1, 128)
    else:
        x2d = x.reshape(-1, orig_shape[-1])  # fallback, still correct

    out2d = pl.pallas_call(
        _elementwise_kernel,
        out_shape=jax.ShapeDtypeStruct(x2d.shape, x2d.dtype),
        # Full-array single block; explicit VMEM to make the single
        # DMA-in / compute / DMA-out intent unambiguous.
        in_specs=[pl.BlockSpec(memory_space=pltpu.MemorySpace.VMEM)],
        out_specs=pl.BlockSpec(memory_space=pltpu.MemorySpace.VMEM),
    )(x2d)
    return out2d.reshape(orig_shape)


if __name__ == "__main__":
    key = jax.random.PRNGKey(0)
    x = jax.random.normal(key, (2, 4, 16, 16), dtype=jnp.float32)

    out = pt_module_forward(x)
    out = jax.block_until_ready(out)

    # Reference (pure JAX) using the original PyTorch op order.
    ref = ((x + 2.0) - 1.0) * 3.0 / 2.0
    for i in range(5):
        ref = ref + float(i)

    assert out.shape == x.shape and out.dtype == x.dtype
    assert jnp.allclose(out, ref, atol=1e-5, rtol=1e-5)

    print("KERNEL_OK")
</pallas_src>

<mosaic_0001>
module attributes {stable_mosaic.version = 11 : i64} {
  func.func @_elementwise_kernel(%arg0: memref<16x128xf32, #tpu.memory_space<vmem>>, %arg1: memref<16x128xf32, #tpu.memory_space<vmem>>) attributes {dimension_semantics = [], scalar_prefetch = 0 : i64, scratch_operands = 0 : i64, tpu.core_type = #tpu.core_type<tc>} {
    %c0 = arith.constant 0 : index
    %c0_0 = arith.constant 0 : index
    %0 = vector.load %arg0[%c0, %c0_0] : memref<16x128xf32, #tpu.memory_space<vmem>>, vector<16x128xf32>
    %cst = arith.constant 1.500000e+00 : f32
    %1 = vector.broadcast %cst : f32 to vector<16x128xf32>
    %2 = arith.mulf %0, %1 : vector<16x128xf32>
    %cst_1 = arith.constant 1.150000e+01 : f32
    %3 = vector.broadcast %cst_1 : f32 to vector<16x128xf32>
    %4 = arith.addf %2, %3 : vector<16x128xf32>
    %c0_2 = arith.constant 0 : index
    %c0_3 = arith.constant 0 : index
    %5 = vector.load %arg1[%c0_2, %c0_3] : memref<16x128xf32, #tpu.memory_space<vmem>>, vector<16x128xf32>
    tpu.vector_store %arg1[%c0_2, %c0_3], %4 {strides = array<i32>} : memref<16x128xf32, #tpu.memory_space<vmem>>, vector<16x128xf32>,
    return
  }
}

</mosaic_0001>

<llo_original>
// kernel: tpu_custom_call.1
$region0: #{tpu_custom_call.1}
  #allocation0 [shape = 'u32[]', space=smem, size = 0x4, offset = 0x4, fixed_abs, tag = 'smem constant byte address 0x4 - core index']
  #allocation1 [shape = 'u32[72,128]{1,0:T(1,128)}', space=vmem, size = 0x9000, scoped, tag = 'internal scratch']
  %s0 = inlined_call_operand.hbm [shape: f32[16,128], index: 0, kind: input, shape index: {}]
  %s1 = inlined_call_operand.hbm [shape: f32[16,128], index: 1, kind: output, shape index: {}]
  %s2 = sld [smem:[#allocation0]]
  $region18: #{tpu_custom_call.1} parent=0
    _
  %s4 = ssub.s32 1, %s2
  %s5 = scalar_select 0, %s4, %s2
  $region1: #{tpu_custom_call.1} parent=0
    #allocation2 [shape = 'u8[8192]{0}', space=vmem, size = 0x2000, scoped, tag = 'input window, operand 0, single buffered']
    #allocation3 [shape = 's32[1]{0}', space=sflag, size = 0x4, scoped, tag = 'scoped memory for tpu_custom_call.1']
    #allocation4 [shape = 's32[1]{0}', space=sflag, size = 0x4, scoped, tag = 'scoped memory for tpu_custom_call.1']
    #allocation5 [shape = 'u8[8192]{0}', space=vmem, size = 0x2000, scoped, tag = 'output window, operand 0, single buffered']
    %6 = vsyncpa [#allocation3], 0
    %7 = vsyncpa [#allocation4], 0
    // Predicated region
    $region2: #{tpu_custom_call.1} parent=1 // pred_check
      _
    $region3: #{tpu_custom_call.1} parent=1 // pred_check_branch
      %9 = sbr.rel (0) target = $region5
    $region4: #{tpu_custom_call.1} parent=1 // pred_region
      %11 = vsyncadd [#allocation3], 0
      %s12 = sshll.u32 %s0, 4
      %s13 = int_to_ptr.hbm [resolvable:$true] %s12
      %s14 = sshll.u32 [#allocation2], 4
      %s15 = int_to_ptr.vmem [resolvable:$true] %s14
      %20 = dma.hbm_to_vmem [thread:$0]  %s13, 256, %s15, [#allocation3], 128, 128, 8
    $region5: #{tpu_custom_call.1} parent=1 // pred_fallthru
      _
    // Predicated region
    $region6: #{tpu_custom_call.1} parent=1 // pred_check
      _
    $region7: #{tpu_custom_call.1} parent=1 // pred_check_branch
      %22 = sbr.rel (0) target = $region9
    $region8: #{tpu_custom_call.1} parent=1 // pred_region
      %24 = dma.done [#allocation3], 256
    $region9: #{tpu_custom_call.1} parent=1 // pred_fallthru
      _
    %v25 = vld [vmem:[#allocation2] sm:$0xff]
    %v26 = vld [vmem:[#allocation2 + $0x8] sm:$0xff]
    %v27 = vmul.f32 %v25, 1.5
    %v28 = vmul.f32 %v26, 1.5
    %v29 = vadd.f32 %v27, 11.5
    %v30 = vadd.f32 %v28, 11.5
    %31 = vst [vmem:[#allocation5] sm:$0xff] %v29
    %32 = vst [vmem:[#allocation5 + $0x8] sm:$0xff] %v30
    // Predicated region
    $region10: #{tpu_custom_call.1} parent=1 // pred_check
      _
    $region11: #{tpu_custom_call.1} parent=1 // pred_check_branch
      %34 = sbr.rel (0) target = $region13
    $region12: #{tpu_custom_call.1} parent=1 // pred_region
      %36 = vsyncadd [#allocation4], 0
      %s37 = sshll.u32 [#allocation5], 4
      %s38 = int_to_ptr.vmem [resolvable:$true] %s37
      %s39 = sshll.u32 %s1, 4
      %s40 = int_to_ptr.hbm [resolvable:$true] %s39
      %45 = dma.vmem_to_hbm [thread:$0]  %s38, 256, %s40, [#allocation4], 128, 128, 8
    $region13: #{tpu_custom_call.1} parent=1 // pred_fallthru
      _
    // Predicated region
    $region14: #{tpu_custom_call.1} parent=1 // pred_check
      _
    $region15: #{tpu_custom_call.1} parent=1 // pred_check_branch
      %47 = sbr.rel (0) target = $region17
    $region16: #{tpu_custom_call.1} parent=1 // pred_region
      %49 = dma.done [#allocation4], 256
    $region17: #{tpu_custom_call.1} parent=1 // pred_fallthru
      _
    %50 = vsyncpa [#allocation3], 1
    %51 = vsyncpa [#allocation4], 1

</llo_original>
